<compile_context>
chip_gen: v7x
topology: tpu7x:2x2x1
jax: 0.10.0
libtpu: 0.0.40
codegen_flags: <defaults>
</compile_context>

<pallas_src>
import functools

import jax
import jax.numpy as jnp
from jax.experimental import pallas as pl
from jax.experimental.pallas import tpu as pltpu


def _dwconv3d_kernel(xc_ref, xp_ref, xn_ref, w_ref, o_ref, *, C, has_halo):
    """Depthwise 3x3x3 conv on a lane-fused (W*C) layout.

    xc_ref : (TD, H, L)   center D-tile, L = W*C (lane axis)
    xp_ref : (H, L)       plane just below the tile (only when has_halo)
    xn_ref : (H, L)       plane just above the tile (only when has_halo)
    w_ref  : (27, H, L)   per-tap weight planes, tap = kd*9 + kh*3 + kw, with
                          the H/W boundary masks already folded in (boundary
                          rows / lane blocks zeroed) -> no in-kernel selects.
    o_ref  : (TD, H, L)
    """
    TD, H, L = xc_ref.shape
    f32 = jnp.float32

    center = xc_ref[...].astype(f32)                                # (TD, H, L)

    if has_halo:
        dt = pl.program_id(1)
        ndt = pl.num_programs(1)
        # Halo planes are clamped copies of planes d-1 / d+TD; zero them at
        # the global volume boundary (padding=1 semantics).  Kept 3-D so the
        # same roll axes apply as for the center tile.
        prev = jnp.where(dt > 0, xp_ref[...].astype(f32), 0.0)[None]        # (1, H, L)
        nxt = jnp.where(dt < ndt - 1, xn_ref[...].astype(f32), 0.0)[None]   # (1, H, L)

    # Shift helpers: wrap-around garbage is killed by the zeroed weight
    # lanes/rows, so no masks are needed here.
    def shift_lane(x, kw):                      # tap at w + (kw - 1)
        s = {0: C % L, 1: 0, 2: (L - C) % L}[kw]
        return x if s == 0 else pltpu.roll(x, s, axis=x.ndim - 1)

    def shift_row(x, kh):                       # tap at h + (kh - 1)
        s = {0: 1 % H, 1: 0, 2: (H - 1) % H}[kh]
        return x if s == 0 else pltpu.roll(x, s, axis=x.ndim - 2)

    acc1 = jnp.zeros((TD, H, L), f32)           # kd == 1 (same input plane)
    if TD > 1:
        acc0 = jnp.zeros((TD - 1, H, L), f32)   # center plane j -> out plane j+1 (kd == 0)
        acc2 = jnp.zeros((TD - 1, H, L), f32)   # center plane j -> out plane j-1 (kd == 2)
    acc0h = jnp.zeros((1, H, L), f32)           # prev halo -> out plane 0      (kd == 0)
    acc2h = jnp.zeros((1, H, L), f32)           # next halo -> out plane TD-1   (kd == 2)

    for kw in range(3):
        cw = shift_lane(center, kw)
        if has_halo:
            pw = shift_lane(prev, kw)
            nw = shift_lane(nxt, kw)
        for kh in range(3):
            zc = shift_row(cw, kh)
            w0 = w_ref[0 * 9 + kh * 3 + kw]     # (H, L) full-vreg weight plane
            w1 = w_ref[1 * 9 + kh * 3 + kw]
            w2 = w_ref[2 * 9 + kh * 3 + kw]

            acc1 = acc1 + zc * w1
            if TD > 1:
                acc0 = acc0 + zc[:TD - 1] * w0
                acc2 = acc2 + zc[1:] * w2
            if has_halo:
                acc0h = acc0h + shift_row(pw, kh) * w0
                acc2h = acc2h + shift_row(nw, kh) * w2

    if TD > 1:
        out = (acc1
               + jnp.concatenate([acc0h, acc0], axis=0)
               + jnp.concatenate([acc2, acc2h], axis=0))
    elif has_halo:
        out = acc1 + acc0h + acc2h
    else:                                       # D == 1: kd = 0/2 are all padding
        out = acc1
    o_ref[...] = out.astype(o_ref.dtype)


def _dwconv3d_kernel_nohalo(xc_ref, w_ref, o_ref, *, C):
    _dwconv3d_kernel(xc_ref, None, None, w_ref, o_ref, C=C, has_halo=False)


def patch_partition(x_ncdhw, weight_c111kkk, *, d_tile=None, storage_dtype=None):
    """PatchPartition forward: depthwise 3D conv, k=3, pad=1, no bias.

    x_ncdhw        : (N, C, D, H, W)  float32, PyTorch layout
    weight_c111kkk : (C, 1, 3, 3, 3)  float32, PyTorch Conv3d weight layout
    storage_dtype  : optional (e.g. jnp.bfloat16 on v6e/v7x) — halves HBM /
                     VMEM traffic; the kernel still accumulates in f32.
    returns        : (N, C, D, H, W)  in the input dtype
    """
    N, C, D, H, W = x_ncdhw.shape
    L = W * C
    out_dtype = x_ncdhw.dtype

    # Layout pass in: NCDHW -> (N, D, H, W*C).  Channels fused onto the lane
    # axis (W*C = 128 for the demo shapes -> fully lane-dense stores).  In an
    # NDHWC-native model this (and the inverse below) disappears.
    x_lane = jnp.transpose(x_ncdhw, (0, 2, 3, 4, 1)).reshape(N, D, H, L)

    # Weights: (C,1,3,3,3) -> (27, C) with tap = kd*9 + kh*3 + kw, tiled over
    # W to a length-L lane vector, then expanded to (27, H, L) planes with the
    # H/W boundary masks folded in:
    #   kw==0 taps: column w==0   has no w-1 neighbour -> zero lanes [0, C)
    #   kw==2 taps: column w==W-1 has no w+1 neighbour -> zero lanes [L-C, L)
    #   kh==0 taps: row h==0      has no h-1 neighbour -> zero row 0
    #   kh==2 taps: row h==H-1    has no h+1 neighbour -> zero row H-1
    w_taps = jnp.transpose(weight_c111kkk[:, 0], (1, 2, 3, 0)).reshape(27, C)
    w_lane = jnp.tile(w_taps, (1, W))                                # (27, L)

    tap = jnp.arange(27)
    kw_idx = tap % 3
    kh_idx = (tap // 3) % 3
    lane = jnp.arange(L)
    row = jnp.arange(H)
    lane_ok = jnp.where(kw_idx[:, None] == 0, lane[None, :] >= C,
                        jnp.where(kw_idx[:, None] == 2, lane[None, :] < L - C,
                                  True))                              # (27, L)
    row_ok = jnp.where(kh_idx[:, None] == 0, row[None, :] >= 1,
                       jnp.where(kh_idx[:, None] == 2, row[None, :] < H - 1,
                                 True))                               # (27, H)
    mask = lane_ok[:, None, :] & row_ok[:, :, None]                   # (27, H, L)
    w_planes = jnp.where(mask, w_lane[:, None, :], 0.0).astype(w_lane.dtype)

    if storage_dtype is not None:
        x_lane = x_lane.astype(storage_dtype)
        w_planes = w_planes.astype(storage_dtype)

    # D-tile: largest divisor of D whose total footprint (double-buffered
    # pipelined blocks + resident weight planes + in-kernel f32 temporaries)
    # stays under a conservative budget (well below the 32 MiB scoped VMEM we
    # request, which itself is safe on v5e/v6e/v7x).  Fewer, bigger tiles cut
    # both per-step overhead and halo read amplification.
    if d_tile is None:
        itemsize = jnp.dtype(x_lane.dtype).itemsize
        plane_in = H * L * itemsize
        plane_f32 = H * L * 4
        budget = 20 * 1024 * 1024

        def footprint(t):
            blocks = 2 * (2 * t * plane_in + 2 * plane_in)   # 2x-buffered in/out + halos
            temps = 27 * plane_f32 + 6 * t * plane_f32        # weights + center/shift/accs
            return blocks + temps

        divs = [t for t in range(1, D + 1) if D % t == 0]
        fits = [t for t in divs if footprint(t) <= budget]
        d_tile = max(fits) if fits else 1
        # v7x has two TensorCores: if batch alone can't feed them, prefer >= 2
        # D-tiles (batch N=2 already covers the demo shapes).
        if N == 1 and d_tile == D:
            multi = [t for t in fits if D // t >= 2]
            if multi:
                d_tile = max(multi)
    TD = d_tile
    assert D % TD == 0, "d_tile must divide D"
    DT = D // TD
    has_halo = DT > 1

    if has_halo:
        kernel = functools.partial(_dwconv3d_kernel, C=C, has_halo=True)
        in_specs = [
            # center tile: TD full (H, W*C) planes
            pl.BlockSpec((None, TD, H, L), lambda n, dt: (n, dt, 0, 0)),
            # halo plane just below the tile (clamped at d=0, masked in-kernel)
            pl.BlockSpec((None, None, H, L),
                         lambda n, dt: (n, jnp.maximum(dt * TD - 1, 0), 0, 0)),
            # halo plane just above the tile (clamped at d=D-1, masked in-kernel)
            pl.BlockSpec((None, None, H, L),
                         lambda n, dt: (n, jnp.minimum(dt * TD + TD, D - 1), 0, 0)),
            # 27 pre-masked weight planes; constant index_map -> resident in VMEM
            pl.BlockSpec((27, H, L), lambda n, dt: (0, 0, 0)),
        ]
        args = (x_lane, x_lane, x_lane, w_planes)
    else:
        kernel = functools.partial(_dwconv3d_kernel_nohalo, C=C)
        in_specs = [
            pl.BlockSpec((None, TD, H, L), lambda n, dt: (n, dt, 0, 0)),
            pl.BlockSpec((27, H, L), lambda n, dt: (0, 0, 0)),
        ]
        args = (x_lane, w_planes)

    out_lane = pl.pallas_call(
        kernel,
        out_shape=jax.ShapeDtypeStruct((N, D, H, L), out_dtype),
        grid_spec=pltpu.PrefetchScalarGridSpec(
            num_scalar_prefetch=0,
            grid=(N, DT),
            in_specs=in_specs,
            out_specs=pl.BlockSpec((None, TD, H, L), lambda n, dt: (n, dt, 0, 0)),
        ),
        compiler_params=pltpu.CompilerParams(
            dimension_semantics=("parallel", "parallel"),
            vmem_limit_bytes=32 * 1024 * 1024),
    )(*args)

    # Layout pass out: back to NCDHW (disappears in an NDHWC-native model).
    out = jnp.transpose(out_lane.reshape(N, D, H, W, C), (0, 4, 1, 2, 3))
    return out.astype(out_dtype)


def _reference(x_ncdhw, weight_c111kkk):
    """Pure-JAX reference: depthwise conv3d via lax.conv_general_dilated."""
    C = x_ncdhw.shape[1]
    return jax.lax.conv_general_dilated(
        x_ncdhw, weight_c111kkk,
        window_strides=(1, 1, 1),
        padding=((1, 1), (1, 1), (1, 1)),
        dimension_numbers=("NCDHW", "OIDHW", "NCDHW"),
        feature_group_count=C,
    )


if __name__ == "__main__":
    # Small shapes consistent with the module: batch=2, channels=16, 8^3 volume.
    # (W*C = 8*16 = 128 -> fully lane-dense compute and stores.)
    N, C, D, H, W = 2, 16, 8, 8, 8

    key = jax.random.PRNGKey(0)
    kx, kw = jax.random.split(key)

    x = jax.random.normal(kx, (N, C, D, H, W), dtype=jnp.float32)

    # Deterministic Conv3d weight init (PyTorch default: U(-b, b), b = 1/sqrt(27)).
    bound = 1.0 / jnp.sqrt(27.0)
    weight = jax.random.uniform(kw, (C, 1, 3, 3, 3), dtype=jnp.float32,
                                minval=-bound, maxval=bound)

    out = patch_partition(x, weight)
    out = jax.block_until_ready(out)

    ref = _reference(x, weight)
    assert out.shape == (N, C, D, H, W)
    assert jnp.allclose(out, ref, atol=1e-5, rtol=1e-5), "mismatch vs reference"

    print("KERNEL_OK")
</pallas_src>

<mosaic_0001>
module attributes {stable_mosaic.version = 11 : i64} {
  func.func @_dwconv3d_kernel_nohalo(%arg0: i32, %arg1: i32, %arg2: memref<1x8x8x128xf32, #tpu.memory_space<vmem>>, %arg3: memref<27x8x128xf32, #tpu.memory_space<vmem>>, %arg4: memref<1x8x8x128xf32, #tpu.memory_space<vmem>>) attributes {dimension_semantics = [#tpu.dimension_semantics<parallel>, #tpu.dimension_semantics<parallel>], iteration_bounds = array<i64: 2, 1>, scalar_prefetch = 0 : i64, scratch_operands = 0 : i64, tpu.core_type = #tpu.core_type<tc>, window_params = [{transform_indices = @transform_0, window_bounds = array<i64: 1, 8, 8, 128>}, {pipeline_mode = #tpu.pipeline_mode<synchronous>, transform_indices = @transform_1, window_bounds = array<i64: 27, 8, 128>}, {transform_indices = @transform_2, window_bounds = array<i64: 1, 8, 8, 128>}]} {
    %c0 = arith.constant 0 : index
    %c0_0 = arith.constant 0 : index
    %c0_1 = arith.constant 0 : index
    %c0_2 = arith.constant 0 : index
    %0 = vector.load %arg2[%c0, %c0_0, %c0_1, %c0_2] : memref<1x8x8x128xf32, #tpu.memory_space<vmem>>, vector<1x8x8x128xf32>
    %1 = vector.shape_cast %0 : vector<1x8x8x128xf32> to vector<8x8x128xf32>
    %cst = arith.constant 0.000000e+00 : f32
    %2 = vector.broadcast %cst : f32 to vector<8x8x128xf32>
    %cst_3 = arith.constant 0.000000e+00 : f32
    %3 = vector.broadcast %cst_3 : f32 to vector<7x8x128xf32>
    %cst_4 = arith.constant 0.000000e+00 : f32
    %4 = vector.broadcast %cst_4 : f32 to vector<7x8x128xf32>
    %cst_5 = arith.constant 0.000000e+00 : f32
    %5 = vector.broadcast %cst_5 : f32 to vector<1x8x128xf32>
    %cst_6 = arith.constant 0.000000e+00 : f32
    %6 = vector.broadcast %cst_6 : f32 to vector<1x8x128xf32>
    %c16_i32 = arith.constant 16 : i32
    %7 = tpu.dynamic_rotate %1 by %c16_i32 dim 2 : vector<8x8x128xf32>, i32 -> vector<8x8x128xf32>
    %c1_i32 = arith.constant 1 : i32
    %8 = tpu.dynamic_rotate %7 by %c1_i32 dim 1 : vector<8x8x128xf32>, i32 -> vector<8x8x128xf32>
    %c0_7 = arith.constant 0 : index
    %c0_8 = arith.constant 0 : index
    %c0_9 = arith.constant 0 : index
    %9 = vector.load %arg3[%c0_7, %c0_8, %c0_9] : memref<27x8x128xf32, #tpu.memory_space<vmem>>, vector<1x8x128xf32>
    %10 = vector.shape_cast %9 : vector<1x8x128xf32> to vector<8x128xf32>
    %c9 = arith.constant 9 : index
    %c0_10 = arith.constant 0 : index
    %c0_11 = arith.constant 0 : index
    %11 = vector.load %arg3[%c9, %c0_10, %c0_11] : memref<27x8x128xf32, #tpu.memory_space<vmem>>, vector<1x8x128xf32>
    %12 = vector.shape_cast %11 : vector<1x8x128xf32> to vector<8x128xf32>
    %c18 = arith.constant 18 : index
    %c0_12 = arith.constant 0 : index
    %c0_13 = arith.constant 0 : index
    %13 = vector.load %arg3[%c18, %c0_12, %c0_13] : memref<27x8x128xf32, #tpu.memory_space<vmem>>, vector<1x8x128xf32>
    %14 = vector.shape_cast %13 : vector<1x8x128xf32> to vector<8x128xf32>
    %15 = vector.shape_cast %12 : vector<8x128xf32> to vector<1x8x128xf32>
    %16 = vector.broadcast %15 : vector<1x8x128xf32> to vector<8x8x128xf32>
    %17 = arith.mulf %8, %16 : vector<8x8x128xf32>
    %18 = arith.addf %2, %17 : vector<8x8x128xf32>
    %19 = vector.extract_strided_slice %8 {offsets = [0, 0, 0], sizes = [7, 8, 128], strides = [1, 1, 1]} : vector<8x8x128xf32> to vector<7x8x128xf32>
    %20 = vector.shape_cast %10 : vector<8x128xf32> to vector<1x8x128xf32>
    %21 = vector.broadcast %20 : vector<1x8x128xf32> to vector<7x8x128xf32>
    %22 = arith.mulf %19, %21 : vector<7x8x128xf32>
    %23 = arith.addf %3, %22 : vector<7x8x128xf32>
    %24 = vector.extract_strided_slice %8 {offsets = [1, 0, 0], sizes = [7, 8, 128], strides = [1, 1, 1]} : vector<8x8x128xf32> to vector<7x8x128xf32>
    %25 = vector.shape_cast %14 : vector<8x128xf32> to vector<1x8x128xf32>
    %26 = vector.broadcast %25 : vector<1x8x128xf32> to vector<7x8x128xf32>
    %27 = arith.mulf %24, %26 : vector<7x8x128xf32>
    %28 = arith.addf %4, %27 : vector<7x8x128xf32>
    %c3 = arith.constant 3 : index
    %c0_14 = arith.constant 0 : index
    %c0_15 = arith.constant 0 : index
    %29 = vector.load %arg3[%c3, %c0_14, %c0_15] : memref<27x8x128xf32, #tpu.memory_space<vmem>>, vector<1x8x128xf32>
    %30 = vector.shape_cast %29 : vector<1x8x128xf32> to vector<8x128xf32>
    %c12 = arith.constant 12 : index
    %c0_16 = arith.constant 0 : index
    %c0_17 = arith.constant 0 : index
    %31 = vector.load %arg3[%c12, %c0_16, %c0_17] : memref<27x8x128xf32, #tpu.memory_space<vmem>>, vector<1x8x128xf32>
    %32 = vector.shape_cast %31 : vector<1x8x128xf32> to vector<8x128xf32>
    %c21 = arith.constant 21 : index
    %c0_18 = arith.constant 0 : index
    %c0_19 = arith.constant 0 : index
    %33 = vector.load %arg3[%c21, %c0_18, %c0_19] : memref<27x8x128xf32, #tpu.memory_space<vmem>>, vector<1x8x128xf32>
    %34 = vector.shape_cast %33 : vector<1x8x128xf32> to vector<8x128xf32>
    %35 = vector.shape_cast %32 : vector<8x128xf32> to vector<1x8x128xf32>
    %36 = vector.broadcast %35 : vector<1x8x128xf32> to vector<8x8x128xf32>
    %37 = arith.mulf %7, %36 : vector<8x8x128xf32>
    %38 = arith.addf %18, %37 : vector<8x8x128xf32>
    %39 = vector.extract_strided_slice %7 {offsets = [0, 0, 0], sizes = [7, 8, 128], strides = [1, 1, 1]} : vector<8x8x128xf32> to vector<7x8x128xf32>
    %40 = vector.shape_cast %30 : vector<8x128xf32> to vector<1x8x128xf32>
    %41 = vector.broadcast %40 : vector<1x8x128xf32> to vector<7x8x128xf32>
    %42 = arith.mulf %39, %41 : vector<7x8x128xf32>
    %43 = arith.addf %23, %42 : vector<7x8x128xf32>
    %44 = vector.extract_strided_slice %7 {offsets = [1, 0, 0], sizes = [7, 8, 128], strides = [1, 1, 1]} : vector<8x8x128xf32> to vector<7x8x128xf32>
    %45 = vector.shape_cast %34 : vector<8x128xf32> to vector<1x8x128xf32>
    %46 = vector.broadcast %45 : vector<1x8x128xf32> to vector<7x8x128xf32>
    %47 = arith.mulf %44, %46 : vector<7x8x128xf32>
    %48 = arith.addf %28, %47 : vector<7x8x128xf32>
    %c7_i32 = arith.constant 7 : i32
    %49 = tpu.dynamic_rotate %7 by %c7_i32 dim 1 : vector<8x8x128xf32>, i32 -> vector<8x8x128xf32>
    %c6 = arith.constant 6 : index
    %c0_20 = arith.constant 0 : index
    %c0_21 = arith.constant 0 : index
    %50 = vector.load %arg3[%c6, %c0_20, %c0_21] : memref<27x8x128xf32, #tpu.memory_space<vmem>>, vector<1x8x128xf32>
    %51 = vector.shape_cast %50 : vector<1x8x128xf32> to vector<8x128xf32>
    %c15 = arith.constant 15 : index
    %c0_22 = arith.constant 0 : index
    %c0_23 = arith.constant 0 : index
    %52 = vector.load %arg3[%c15, %c0_22, %c0_23] : memref<27x8x128xf32, #tpu.memory_space<vmem>>, vector<1x8x128xf32>
    %53 = vector.shape_cast %52 : vector<1x8x128xf32> to vector<8x128xf32>
    %c24 = arith.constant 24 : index
    %c0_24 = arith.constant 0 : index
    %c0_25 = arith.constant 0 : index
    %54 = vector.load %arg3[%c24, %c0_24, %c0_25] : memref<27x8x128xf32, #tpu.memory_space<vmem>>, vector<1x8x128xf32>
    %55 = vector.shape_cast %54 : vector<1x8x128xf32> to vector<8x128xf32>
    %56 = vector.shape_cast %53 : vector<8x128xf32> to vector<1x8x128xf32>
    %57 = vector.broadcast %56 : vector<1x8x128xf32> to vector<8x8x128xf32>
    %58 = arith.mulf %49, %57 : vector<8x8x128xf32>
    %59 = arith.addf %38, %58 : vector<8x8x128xf32>
    %60 = vector.extract_strided_slice %49 {offsets = [0, 0, 0], sizes = [7, 8, 128], strides = [1, 1, 1]} : vector<8x8x128xf32> to vector<7x8x128xf32>
    %61 = vector.shape_cast %51 : vector<8x128xf32> to vector<1x8x128xf32>
    %62 = vector.broadcast %61 : vector<1x8x128xf32> to vector<7x8x128xf32>
    %63 = arith.mulf %60, %62 : vector<7x8x128xf32>
    %64 = arith.addf %43, %63 : vector<7x8x128xf32>
    %65 = vector.extract_strided_slice %49 {offsets = [1, 0, 0], sizes = [7, 8, 128], strides = [1, 1, 1]} : vector<8x8x128xf32> to vector<7x8x128xf32>
    %66 = vector.shape_cast %55 : vector<8x128xf32> to vector<1x8x128xf32>
    %67 = vector.broadcast %66 : vector<1x8x128xf32> to vector<7x8x128xf32>
    %68 = arith.mulf %65, %67 : vector<7x8x128xf32>
    %69 = arith.addf %48, %68 : vector<7x8x128xf32>
    %c1_i32_26 = arith.constant 1 : i32
    %70 = tpu.dynamic_rotate %1 by %c1_i32_26 dim 1 : vector<8x8x128xf32>, i32 -> vector<8x8x128xf32>
    %c1 = arith.constant 1 : index
    %c0_27 = arith.constant 0 : index
    %c0_28 = arith.constant 0 : index
    %71 = vector.load %arg3[%c1, %c0_27, %c0_28] : memref<27x8x128xf32, #tpu.memory_space<vmem>>, vector<1x8x128xf32>
    %72 = vector.shape_cast %71 : vector<1x8x128xf32> to vector<8x128xf32>
    %c10 = arith.constant 10 : index
    %c0_29 = arith.constant 0 : index
    %c0_30 = arith.constant 0 : index
    %73 = vector.load %arg3[%c10, %c0_29, %c0_30] : memref<27x8x128xf32, #tpu.memory_space<vmem>>, vector<1x8x128xf32>
    %74 = vector.shape_cast %73 : vector<1x8x128xf32> to vector<8x128xf32>
    %c19 = arith.constant 19 : index
    %c0_31 = arith.constant 0 : index
    %c0_32 = arith.constant 0 : index
    %75 = vector.load %arg3[%c19, %c0_31, %c0_32] : memref<27x8x128xf32, #tpu.memory_space<vmem>>, vector<1x8x128xf32>
    %76 = vector.shape_cast %75 : vector<1x8x128xf32> to vector<8x128xf32>
    %77 = vector.shape_cast %74 : vector<8x128xf32> to vector<1x8x128xf32>
    %78 = vector.broadcast %77 : vector<1x8x128xf32> to vector<8x8x128xf32>
    %79 = arith.mulf %70, %78 : vector<8x8x128xf32>
    %80 = arith.addf %59, %79 : vector<8x8x128xf32>
    %81 = vector.extract_strided_slice %70 {offsets = [0, 0, 0], sizes = [7, 8, 128], strides = [1, 1, 1]} : vector<8x8x128xf32> to vector<7x8x128xf32>
    %82 = vector.shape_cast %72 : vector<8x128xf32> to vector<1x8x128xf32>
    %83 = vector.broadcast %82 : vector<1x8x128xf32> to vector<7x8x128xf32>
    %84 = arith.mulf %81, %83 : vector<7x8x128xf32>
    %85 = arith.addf %64, %84 : vector<7x8x128xf32>
    %86 = vector.extract_strided_slice %70 {offsets = [1, 0, 0], sizes = [7, 8, 128], strides = [1, 1, 1]} : vector<8x8x128xf32> to vector<7x8x128xf32>
    %87 = vector.shape_cast %76 : vector<8x128xf32> to vector<1x8x128xf32>
    %88 = vector.broadcast %87 : vector<1x8x128xf32> to vector<7x8x128xf32>
    %89 = arith.mulf %86, %88 : vector<7x8x128xf32>
    %90 = arith.addf %69, %89 : vector<7x8x128xf32>
    %c4 = arith.constant 4 : index
    %c0_33 = arith.constant 0 : index
    %c0_34 = arith.constant 0 : index
    %91 = vector.load %arg3[%c4, %c0_33, %c0_34] : memref<27x8x128xf32, #tpu.memory_space<vmem>>, vector<1x8x128xf32>
    %92 = vector.shape_cast %91 : vector<1x8x128xf32> to vector<8x128xf32>
    %c13 = arith.constant 13 : index
    %c0_35 = arith.constant 0 : index
    %c0_36 = arith.constant 0 : index
    %93 = vector.load %arg3[%c13, %c0_35, %c0_36] : memref<27x8x128xf32, #tpu.memory_space<vmem>>, vector<1x8x128xf32>
    %94 = vector.shape_cast %93 : vector<1x8x128xf32> to vector<8x128xf32>
    %c22 = arith.constant 22 : index
    %c0_37 = arith.constant 0 : index
    %c0_38 = arith.constant 0 : index
    %95 = vector.load %arg3[%c22, %c0_37, %c0_38] : memref<27x8x128xf32, #tpu.memory_space<vmem>>, vector<1x8x128xf32>
    %96 = vector.shape_cast %95 : vector<1x8x128xf32> to vector<8x128xf32>
    %97 = vector.shape_cast %94 : vector<8x128xf32> to vector<1x8x128xf32>
    %98 = vector.broadcast %97 : vector<1x8x128xf32> to vector<8x8x128xf32>
    %99 = arith.mulf %1, %98 : vector<8x8x128xf32>
    %100 = arith.addf %80, %99 : vector<8x8x128xf32>
    %101 = vector.extract_strided_slice %1 {offsets = [0, 0, 0], sizes = [7, 8, 128], strides = [1, 1, 1]} : vector<8x8x128xf32> to vector<7x8x128xf32>
    %102 = vector.shape_cast %92 : vector<8x128xf32> to vector<1x8x128xf32>
    %103 = vector.broadcast %102 : vector<1x8x128xf32> to vector<7x8x128xf32>
    %104 = arith.mulf %101, %103 : vector<7x8x128xf32>
    %105 = arith.addf %85, %104 : vector<7x8x128xf32>
    %106 = vector.extract_strided_slice %1 {offsets = [1, 0, 0], sizes = [7, 8, 128], strides = [1, 1, 1]} : vector<8x8x128xf32> to vector<7x8x128xf32>
    %107 = vector.shape_cast %96 : vector<8x128xf32> to vector<1x8x128xf32>
    %108 = vector.broadcast %107 : vector<1x8x128xf32> to vector<7x8x128xf32>
    %109 = arith.mulf %106, %108 : vector<7x8x128xf32>
    %110 = arith.addf %90, %109 : vector<7x8x128xf32>
    %c7_i32_39 = arith.constant 7 : i32
    %111 = tpu.dynamic_rotate %1 by %c7_i32_39 dim 1 : vector<8x8x128xf32>, i32 -> vector<8x8x128xf32>
    %c7 = arith.constant 7 : index
    %c0_40 = arith.constant 0 : index
    %c0_41 = arith.constant 0 : index
    %112 = vector.load %arg3[%c7, %c0_40, %c0_41] : memref<27x8x128xf32, #tpu.memory_space<vmem>>, vector<1x8x128xf32>
    %113 = vector.shape_cast %112 : vector<1x8x128xf32> to vector<8x128xf32>
    %c16 = arith.constant 16 : index
    %c0_42 = arith.constant 0 : index
    %c0_43 = arith.constant 0 : index
    %114 = vector.load %arg3[%c16, %c0_42, %c0_43] : memref<27x8x128xf32, #tpu.memory_space<vmem>>, vector<1x8x128xf32>
    %115 = vector.shape_cast %114 : vector<1x8x128xf32> to vector<8x128xf32>
    %c25 = arith.constant 25 : index
    %c0_44 = arith.constant 0 : index
    %c0_45 = arith.constant 0 : index
    %116 = vector.load %arg3[%c25, %c0_44, %c0_45] : memref<27x8x128xf32, #tpu.memory_space<vmem>>, vector<1x8x128xf32>
    %117 = vector.shape_cast %116 : vector<1x8x128xf32> to vector<8x128xf32>
    %118 = vector.shape_cast %115 : vector<8x128xf32> to vector<1x8x128xf32>
    %119 = vector.broadcast %118 : vector<1x8x128xf32> to vector<8x8x128xf32>
    %120 = arith.mulf %111, %119 : vector<8x8x128xf32>
    %121 = arith.addf %100, %120 : vector<8x8x128xf32>
    %122 = vector.extract_strided_slice %111 {offsets = [0, 0, 0], sizes = [7, 8, 128], strides = [1, 1, 1]} : vector<8x8x128xf32> to vector<7x8x128xf32>
    %123 = vector.shape_cast %113 : vector<8x128xf32> to vector<1x8x128xf32>
    %124 = vector.broadcast %123 : vector<1x8x128xf32> to vector<7x8x128xf32>
    %125 = arith.mulf %122, %124 : vector<7x8x128xf32>
    %126 = arith.addf %105, %125 : vector<7x8x128xf32>
    %127 = vector.extract_strided_slice %111 {offsets = [1, 0, 0], sizes = [7, 8, 128], strides = [1, 1, 1]} : vector<8x8x128xf32> to vector<7x8x128xf32>
    %128 = vector.shape_cast %117 : vector<8x128xf32> to vector<1x8x128xf32>
    %129 = vector.broadcast %128 : vector<1x8x128xf32> to vector<7x8x128xf32>
    %130 = arith.mulf %127, %129 : vector<7x8x128xf32>
    %131 = arith.addf %110, %130 : vector<7x8x128xf32>
    %c112_i32 = arith.constant 112 : i32
    %132 = tpu.dynamic_rotate %1 by %c112_i32 dim 2 : vector<8x8x128xf32>, i32 -> vector<8x8x128xf32>
    %c1_i32_46 = arith.constant 1 : i32
    %133 = tpu.dynamic_rotate %132 by %c1_i32_46 dim 1 : vector<8x8x128xf32>, i32 -> vector<8x8x128xf32>
    %c2 = arith.constant 2 : index
    %c0_47 = arith.constant 0 : index
    %c0_48 = arith.constant 0 : index
    %134 = vector.load %arg3[%c2, %c0_47, %c0_48] : memref<27x8x128xf32, #tpu.memory_space<vmem>>, vector<1x8x128xf32>
    %135 = vector.shape_cast %134 : vector<1x8x128xf32> to vector<8x128xf32>
    %c11 = arith.constant 11 : index
    %c0_49 = arith.constant 0 : index
    %c0_50 = arith.constant 0 : index
    %136 = vector.load %arg3[%c11, %c0_49, %c0_50] : memref<27x8x128xf32, #tpu.memory_space<vmem>>, vector<1x8x128xf32>
    %137 = vector.shape_cast %136 : vector<1x8x128xf32> to vector<8x128xf32>
    %c20 = arith.constant 20 : index
    %c0_51 = arith.constant 0 : index
    %c0_52 = arith.constant 0 : index
    %138 = vector.load %arg3[%c20, %c0_51, %c0_52] : memref<27x8x128xf32, #tpu.memory_space<vmem>>, vector<1x8x128xf32>
    %139 = vector.shape_cast %138 : vector<1x8x128xf32> to vector<8x128xf32>
    %140 = vector.shape_cast %137 : vector<8x128xf32> to vector<1x8x128xf32>
    %141 = vector.broadcast %140 : vector<1x8x128xf32> to vector<8x8x128xf32>
    %142 = arith.mulf %133, %141 : vector<8x8x128xf32>
    %143 = arith.addf %121, %142 : vector<8x8x128xf32>
    %144 = vector.extract_strided_slice %133 {offsets = [0, 0, 0], sizes = [7, 8, 128], strides = [1, 1, 1]} : vector<8x8x128xf32> to vector<7x8x128xf32>
    %145 = vector.shape_cast %135 : vector<8x128xf32> to vector<1x8x128xf32>
    %146 = vector.broadcast %145 : vector<1x8x128xf32> to vector<7x8x128xf32>
    %147 = arith.mulf %144, %146 : vector<7x8x128xf32>
    %148 = arith.addf %126, %147 : vector<7x8x128xf32>
    %149 = vector.extract_strided_slice %133 {offsets = [1, 0, 0], sizes = [7, 8, 128], strides = [1, 1, 1]} : vector<8x8x128xf32> to vector<7x8x128xf32>
    %150 = vector.shape_cast %139 : vector<8x128xf32> to vector<1x8x128xf32>
    %151 = vector.broadcast %150 : vector<1x8x128xf32> to vector<7x8x128xf32>
    %152 = arith.mulf %149, %151 : vector<7x8x128xf32>
    %153 = arith.addf %131, %152 : vector<7x8x128xf32>
    %c5 = arith.constant 5 : index
    %c0_53 = arith.constant 0 : index
    %c0_54 = arith.constant 0 : index
    %154 = vector.load %arg3[%c5, %c0_53, %c0_54] : memref<27x8x128xf32, #tpu.memory_space<vmem>>, vector<1x8x128xf32>
    %155 = vector.shape_cast %154 : vector<1x8x128xf32> to vector<8x128xf32>
    %c14 = arith.constant 14 : index
    %c0_55 = arith.constant 0 : index
    %c0_56 = arith.constant 0 : index
    %156 = vector.load %arg3[%c14, %c0_55, %c0_56] : memref<27x8x128xf32, #tpu.memory_space<vmem>>, vector<1x8x128xf32>
    %157 = vector.shape_cast %156 : vector<1x8x128xf32> to vector<8x128xf32>
    %c23 = arith.constant 23 : index
    %c0_57 = arith.constant 0 : index
    %c0_58 = arith.constant 0 : index
    %158 = vector.load %arg3[%c23, %c0_57, %c0_58] : memref<27x8x128xf32, #tpu.memory_space<vmem>>, vector<1x8x128xf32>
    %159 = vector.shape_cast %158 : vector<1x8x128xf32> to vector<8x128xf32>
    %160 = vector.shape_cast %157 : vector<8x128xf32> to vector<1x8x128xf32>
    %161 = vector.broadcast %160 : vector<1x8x128xf32> to vector<8x8x128xf32>
    %162 = arith.mulf %132, %161 : vector<8x8x128xf32>
    %163 = arith.addf %143, %162 : vector<8x8x128xf32>
    %164 = vector.extract_strided_slice %132 {offsets = [0, 0, 0], sizes = [7, 8, 128], strides = [1, 1, 1]} : vector<8x8x128xf32> to vector<7x8x128xf32>
    %165 = vector.shape_cast %155 : vector<8x128xf32> to vector<1x8x128xf32>
    %166 = vector.broadcast %165 : vector<1x8x128xf32> to vector<7x8x128xf32>
    %167 = arith.mulf %164, %166 : vector<7x8x128xf32>
    %168 = arith.addf %148, %167 : vector<7x8x128xf32>
    %169 = vector.extract_strided_slice %132 {offsets = [1, 0, 0], sizes = [7, 8, 128], strides = [1, 1, 1]} : vector<8x8x128xf32> to vector<7x8x128xf32>
    %170 = vector.shape_cast %159 : vector<8x128xf32> to vector<1x8x128xf32>
    %171 = vector.broadcast %170 : vector<1x8x128xf32> to vector<7x8x128xf32>
    %172 = arith.mulf %169, %171 : vector<7x8x128xf32>
    %173 = arith.addf %153, %172 : vector<7x8x128xf32>
    %c7_i32_59 = arith.constant 7 : i32
    %174 = tpu.dynamic_rotate %132 by %c7_i32_59 dim 1 : vector<8x8x128xf32>, i32 -> vector<8x8x128xf32>
    %c8 = arith.constant 8 : index
    %c0_60 = arith.constant 0 : index
    %c0_61 = arith.constant 0 : index
    %175 = vector.load %arg3[%c8, %c0_60, %c0_61] : memref<27x8x128xf32, #tpu.memory_space<vmem>>, vector<1x8x128xf32>
    %176 = vector.shape_cast %175 : vector<1x8x128xf32> to vector<8x128xf32>
    %c17 = arith.constant 17 : index
    %c0_62 = arith.constant 0 : index
    %c0_63 = arith.constant 0 : index
    %177 = vector.load %arg3[%c17, %c0_62, %c0_63] : memref<27x8x128xf32, #tpu.memory_space<vmem>>, vector<1x8x128xf32>
    %178 = vector.shape_cast %177 : vector<1x8x128xf32> to vector<8x128xf32>
    %c26 = arith.constant 26 : index
    %c0_64 = arith.constant 0 : index
    %c0_65 = arith.constant 0 : index
    %179 = vector.load %arg3[%c26, %c0_64, %c0_65] : memref<27x8x128xf32, #tpu.memory_space<vmem>>, vector<1x8x128xf32>
    %180 = vector.shape_cast %179 : vector<1x8x128xf32> to vector<8x128xf32>
    %181 = vector.shape_cast %178 : vector<8x128xf32> to vector<1x8x128xf32>
    %182 = vector.broadcast %181 : vector<1x8x128xf32> to vector<8x8x128xf32>
    %183 = arith.mulf %174, %182 : vector<8x8x128xf32>
    %184 = arith.addf %163, %183 : vector<8x8x128xf32>
    %185 = vector.extract_strided_slice %174 {offsets = [0, 0, 0], sizes = [7, 8, 128], strides = [1, 1, 1]} : vector<8x8x128xf32> to vector<7x8x128xf32>
    %186 = vector.shape_cast %176 : vector<8x128xf32> to vector<1x8x128xf32>
    %187 = vector.broadcast %186 : vector<1x8x128xf32> to vector<7x8x128xf32>
    %188 = arith.mulf %185, %187 : vector<7x8x128xf32>
    %189 = arith.addf %168, %188 : vector<7x8x128xf32>
    %190 = vector.extract_strided_slice %174 {offsets = [1, 0, 0], sizes = [7, 8, 128], strides = [1, 1, 1]} : vector<8x8x128xf32> to vector<7x8x128xf32>
    %191 = vector.shape_cast %180 : vector<8x128xf32> to vector<1x8x128xf32>
    %192 = vector.broadcast %191 : vector<1x8x128xf32> to vector<7x8x128xf32>
    %193 = arith.mulf %190, %192 : vector<7x8x128xf32>
    %194 = arith.addf %173, %193 : vector<7x8x128xf32>
    %195 = tpu.concatenate %5, %189 in 0 : vector<1x8x128xf32>, vector<7x8x128xf32> -> vector<8x8x128xf32>
    %196 = arith.addf %184, %195 : vector<8x8x128xf32>
    %197 = tpu.concatenate %194, %6 in 0 : vector<7x8x128xf32>, vector<1x8x128xf32> -> vector<8x8x128xf32>
    %198 = arith.addf %196, %197 : vector<8x8x128xf32>
    %c0_66 = arith.constant 0 : index
    %c0_67 = arith.constant 0 : index
    %c0_68 = arith.constant 0 : index
    %c0_69 = arith.constant 0 : index
    %199 = vector.load %arg4[%c0_66, %c0_67, %c0_68, %c0_69] : memref<1x8x8x128xf32, #tpu.memory_space<vmem>>, vector<1x8x8x128xf32>
    %200 = vector.shape_cast %199 : vector<1x8x8x128xf32> to vector<8x8x128xf32>
    %201 = vector.shape_cast %198 : vector<8x8x128xf32> to vector<1x8x8x128xf32>
    tpu.vector_store %arg4[%c0_66, %c0_67, %c0_68, %c0_69], %201 {strides = array<i32>} : memref<1x8x8x128xf32, #tpu.memory_space<vmem>>, vector<1x8x8x128xf32>,
    return
  }
  func.func @transform_0(%arg0: i32, %arg1: i32) -> (i32, i32, i32, i32) {
    %c0_i32 = arith.constant 0 : i32
    %c0_i32_0 = arith.constant 0 : i32
    %c0_i32_1 = arith.constant 0 : i32
    return %arg0, %arg1, %c0_i32, %c0_i32_0 : i32, i32, i32, i32
  }
  func.func @transform_1(%arg0: i32, %arg1: i32) -> (i32, i32, i32) {
    %c0_i32 = arith.constant 0 : i32
    %c0_i32_0 = arith.constant 0 : i32
    %c0_i32_1 = arith.constant 0 : i32
    %c0_i32_2 = arith.constant 0 : i32
    return %c0_i32, %c0_i32_0, %c0_i32_1 : i32, i32, i32
  }
  func.func @transform_2(%arg0: i32, %arg1: i32) -> (i32, i32, i32, i32) {
    %c0_i32 = arith.constant 0 : i32
    %c0_i32_0 = arith.constant 0 : i32
    %c0_i32_1 = arith.constant 0 : i32
    return %arg0, %arg1, %c0_i32, %c0_i32_0 : i32, i32, i32, i32
  }
}

</mosaic_0001>

<llo_original>
// kernel: tpu_custom_call.1
$region0: #{tpu_custom_call.1}
  #allocation0 [shape = 'u32[]', space=smem, size = 0x4, offset = 0x4, fixed_abs, tag = 'smem constant byte address 0x4 - core index']
  #allocation1 [shape = 'u32[144,128]{1,0:T(1,128)}', space=vmem, size = 0x12000, scoped, tag = 'internal scratch']
  %s0 = inlined_call_operand.hbm [shape: f32[2,8,8,128], index: 0, kind: input, shape index: {}]
  %s1 = inlined_call_operand.hbm [shape: f32[27,8,128], index: 1, kind: input, shape index: {}]
  %s2 = inlined_call_operand.hbm [shape: f32[2,8,8,128], index: 2, kind: output, shape index: {}]
  %s3 = sld [smem:[#allocation0]]
  $region49: #{tpu_custom_call.1} parent=0
    _
  %s5 = ssub.s32 1, %s3
  %s6 = scalar_select 0, %s5, %s3
  $region1: #{tpu_custom_call.1} parent=0
    #allocation2 [shape = 'u8[65536]{0}', space=vmem, size = 0x10000, scoped, tag = 'input window, operand 0']
    #allocation3 [shape = 's32[2]{0}', space=sflag, size = 0x8, scoped, tag = 'scoped memory for tpu_custom_call.1']
    #allocation4 [shape = 's32[2]{0}', space=sflag, size = 0x8, scoped, tag = 'scoped memory for tpu_custom_call.1']
    #allocation5 [shape = 'u8[110592]{0}', space=vmem, size = 0x1b000, scoped, tag = 'input window, operand 1, single buffered']
    #allocation6 [shape = 's32[1]{0}', space=sflag, size = 0x4, scoped, tag = 'scoped memory for tpu_custom_call.1']
    #allocation7 [shape = 'u8[65536]{0}', space=vmem, size = 0x10000, scoped, tag = 'output window, operand 0']
    %7 = vsyncpa [#allocation3], 0
    %s8 = scalar_lea.sflag [#allocation3], 1
    %9 = vsyncpa %s8, 0
    %10 = vsyncpa [#allocation6], 0
    %11 = vsyncpa [#allocation4], 0
    %s12 = scalar_lea.sflag [#allocation4], 1
    %13 = vsyncpa %s12, 0
    loop: start=0, step=1, limit=4
    $region2: #{tpu_custom_call.1} parent=1 // loop_pre_header
      _
    $region3: #{tpu_custom_call.1} parent=1 // loop_header
      %s15 = sphi 0, %s19
      %p16 = scmp.ge.s32.totalorder %s15, 4
      %s22 = sphi 0, %s34
      %s23 = sphi 0, %s30
      %s24 = sphi 0, %s22
      %s25 = sphi 0, %s23
      %s26 = sphi 0, %s24
      %s27 = sphi 0, %s25
      %s39 = sphi 0, %s41
      %s42 = sphi 0, %s39
      %s43 = sphi 0, %s42
      %s59 = sphi 0, %s43
      %s63 = sphi 0, %s63
      %s65 = sphi 0, %s63
      %s66 = sphi 0, %s65
      %s80 = sphi 0, %s66
      %s88 = sphi 0, %s90
      %s91 = sphi 0, %s88
      %s92 = sphi 0, %s91
      %s108 = sphi 0, %s92
    $region4: #{tpu_custom_call.1} parent=1 // loop_header_branch
      %18 = sbr.rel (%p16) target = $region8
    $region5: #{tpu_custom_call.1} parent=1 // loop_body
      %s20 = ssub.s32 %s15, 1
      %s21 = ssub.s32 %s15, 2
      %s28 = sadd.s32 1, %s23
      %p29 = scmp.ge.s32.totalorder %s28, 1
      %s30 = scalar_select %p29, 0, %s28
      %s31 = sadd.s32 1, %s22
      %s32 = scalar_select %p29, %s31, %s22
      %p33 = scmp.ge.s32.totalorder %s32, 2
      %s34 = scalar_select %p33, 0, %s32
      %s35 = ssub.s32 %s22, %s34
      %s36 = ssub.s32 %s23, %s30
      %s37 = sor.u32 %s35, %s36
      %p38 = scmp.eq.s32.totalorder %s37, 0
      %s40 = sadd.s32 %s39, 1
      %s41 = scalar_select %p38, %s39, %s40
      %p44 = pneg %p38
      %p45 = scmp.eq.s32.totalorder %s15, 1
      %p46 = por %p44, %p45
      %p47 = scmp.ne.s32.totalorder %s39, %s42
      %p48 = scmp.eq.s32.totalorder %s15, 0
      %p49 = por %p47, %p48
      %p50 = scmp.ne.s32.totalorder %s39, %s42
      %p51 = scmp.eq.s32.totalorder %s20, 1
      %p52 = por %p50, %p51
      %p53 = scmp.ne.s32.totalorder %s42, %s43
      %p54 = scmp.eq.s32.totalorder %s20, 0
      %p55 = por %p53, %p54
      %p56 = scmp.ne.s32.totalorder %s42, %s43
      %p57 = scmp.eq.s32.totalorder %s21, 1
      %p58 = por %p56, %p57
      %p60 = scmp.ne.s32.totalorder %s43, %s59
      %p61 = scmp.eq.s32.totalorder %s21, 0
      %p62 = por %p60, %p61
      %s64 = sadd.s32 %s63, 1
      %p67 = scmp.eq.s32.totalorder %s15, 1
      %p68 = scmp.ne.s32.totalorder %s63, %s65
      %p69 = scmp.eq.s32.totalorder %s15, 0
      %p70 = por %p68, %p69
      %p71 = scmp.ne.s32.totalorder %s63, %s65
      %p72 = scmp.eq.s32.totalorder %s20, 1
      %p73 = por %p71, %p72
      %p74 = scmp.ne.s32.totalorder %s65, %s66
      %p75 = scmp.eq.s32.totalorder %s20, 0
      %p76 = por %p74, %p75
      %p77 = scmp.ne.s32.totalorder %s65, %s66
      %p78 = scmp.eq.s32.totalorder %s21, 1
      %p79 = por %p77, %p78
      %p81 = scmp.ne.s32.totalorder %s66, %s80
      %p82 = scmp.eq.s32.totalorder %s21, 0
      %p83 = por %p81, %p82
      %s84 = ssub.s32 %s22, %s34
      %s85 = ssub.s32 %s23, %s30
      %s86 = sor.u32 %s84, %s85
      %p87 = scmp.eq.s32.totalorder %s86, 0
      %s89 = sadd.s32 %s88, 1
      %s90 = scalar_select %p87, %s88, %s89
      %p93 = pneg %p87
      %p94 = scmp.eq.s32.totalorder %s15, 1
      %p95 = por %p93, %p94
      %p96 = scmp.ne.s32.totalorder %s88, %s91
      %p97 = scmp.eq.s32.totalorder %s15, 0
      %p98 = por %p96, %p97
      %p99 = scmp.ne.s32.totalorder %s88, %s91
      %p100 = scmp.eq.s32.totalorder %s20, 1
      %p101 = por %p99, %p100
      %p102 = scmp.ne.s32.totalorder %s91, %s92
      %p103 = scmp.eq.s32.totalorder %s20, 0
      %p104 = por %p102, %p103
      %p105 = scmp.ne.s32.totalorder %s91, %s92
      %p106 = scmp.eq.s32.totalorder %s21, 1
      %p107 = por %p105, %p106
      %p109 = scmp.ne.s32.totalorder %s92, %s108
      %p110 = scmp.eq.s32.totalorder %s21, 0
      %p111 = por %p109, %p110
      %p112 = scmp.le.s32.totalorder 1, %s15
      %p113 = scmp.lt.s32.totalorder %s15, 3
      %p114 = pnand %p112, %p113
      %p115 = pneg %p114
      // Predicated region
      $region9: #{tpu_custom_call.1} parent=5 // pred_check
        _
      $region10: #{tpu_custom_call.1} parent=5 // pred_check_branch
        %117 = sbr.rel (%p114) target = $region12
      $region11: #{tpu_custom_call.1} parent=5 // pred_region
        %s118 = ssub.s32 %s15, 1
        // Predicated region
        $region13: #{tpu_custom_call.1} parent=11 // pred_check
          %p119 = pneg %p76
        $region14: #{tpu_custom_call.1} parent=11 // pred_check_branch
          %121 = sbr.rel (%p119) target = $region16
        $region15: #{tpu_custom_call.1} parent=11 // pred_region
          %s123 = ssub.s32 3456, 3456
          %124 = vsyncadd [#allocation6], %s123
          %s125 = sshll.u32 [#allocation5], 4
          %s126 = int_to_ptr.vmem [resolvable:$true] %s125
          %131 = dma.hbm_to_vmem [thread:$0]  %s1, 3456, %s126, [#allocation6], 128, 128, 8
        $region16: #{tpu_custom_call.1} parent=11 // pred_fallthru
          _
      $region12: #{tpu_custom_call.1} parent=5 // pred_fallthru
        _
      %p132 = scmp.lt.s32.totalorder %s15, 2
      // Predicated region
      $region17: #{tpu_custom_call.1} parent=5 // pred_check
        %p133 = pneg %p132
      $region18: #{tpu_custom_call.1} parent=5 // pred_check_branch
        %135 = sbr.rel (%p133) target = $region20
      $region19: #{tpu_custom_call.1} parent=5 // pred_region
        // Predicated region
        $region21: #{tpu_custom_call.1} parent=19 // pred_check
          %p136 = pneg %p49
        $region22: #{tpu_custom_call.1} parent=19 // pred_check_branch
          %138 = sbr.rel (%p136) target = $region24
        $region23: #{tpu_custom_call.1} parent=19 // pred_region
          %s139 = sand.u32 %s39, 1
          %s140 = scalar_lea.sflag [#allocation3], %s139
          %s141 = sand.u32 %s39, 1
          %s142 = smul.addr %s141, 64
          %s143 = scalar_lea.vmem [#allocation2], %s142
          %s144 = smul.u32 8, %s23
          %s146 = ssub.s32 1024, 1024
          %147 = vsyncadd %s140, %s146
          %s148 = smul.addr %s22, 8
          %s149 = sadd.s32 %s144, %s148
          %s150 = smul.addr %s149, 128
          %s151 = scalar_lea.hbm %s0, %s150
          %s152 = sshll.u32 %s143, 4
          %s153 = int_to_ptr.vmem [resolvable:$true] %s152
          %158 = dma.hbm_to_vmem [thread:$0]  %s151, 1024, %s153, %s140, 128, 128, 8
        $region24: #{tpu_custom_call.1} parent=19 // pred_fallthru
          _
      $region20: #{tpu_custom_call.1} parent=5 // pred_fallthru
        _
      %p159 = scmp.le.s32.totalorder 1, %s15
      %p160 = scmp.lt.s32.totalorder %s15, 3
      %p161 = pnand %p159, %p160
      %p162 = pneg %p161
      // Predicated region
      $region25: #{tpu_custom_call.1} parent=5 // pred_check
        _
      $region26: #{tpu_custom_call.1} parent=5 // pred_check_branch
        %164 = sbr.rel (%p161) target = $region28
      $region27: #{tpu_custom_call.1} parent=5 // pred_region
        %s165 = ssub.s32 %s15, 1
        %s166 = sand.u32 %s42, 1
        %s167 = scalar_lea.sflag [#allocation3], %s166
        %s168 = sand.u32 %s42, 1
        %s169 = smul.addr %s168, 64
        %s170 = scalar_lea.vmem [#allocation2], %s169
        // Predicated region
        $region29: #{tpu_custom_call.1} parent=27 // pred_check
          %p171 = pneg %p55
        $region30: #{tpu_custom_call.1} parent=27 // pred_check_branch
          %173 = sbr.rel (%p171) target = $region32
        $region31: #{tpu_custom_call.1} parent=27 // pred_region
          %174 = dma.done %s167, 1024
        $region32: #{tpu_custom_call.1} parent=27 // pred_fallthru
          _
        // Predicated region
        $region33: #{tpu_custom_call.1} parent=27 // pred_check
          %p175 = pneg %p76
        $region34: #{tpu_custom_call.1} parent=27 // pred_check_branch
          %177 = sbr.rel (%p175) target = $region36
        $region35: #{tpu_custom_call.1} parent=27 // pred_region
          %178 = dma.done [#allocation6], 3456
        $region36: #{tpu_custom_call.1} parent=27 // pred_fallthru
          _
        %s179 = sand.u32 %s42, 1
        %s180 = scalar_lea.sflag [#allocation3], %s179
        %s181 = sand.u32 %s42, 1
        %s182 = smul.addr %s181, 64
        %s183 = scalar_lea.vmem [#allocation2], %s182
        %p184 = pneg %p55
        %p185 = pneg %p52
        %p186 = pneg %p76
        %p187 = pneg %p73
        %p188 = pneg %p104
        %p189 = pneg %p101
        %s190 = sand.u32 %s91, 1
        %s191 = scalar_lea.sflag [#allocation4], %s190
        %s192 = sand.u32 %s91, 1
        %s193 = smul.addr %s192, 64
        %s194 = scalar_lea.vmem [#allocation7], %s193
        %s195 = smul.u32 8, %s25
        %s196 = smul.u32 8, %s25
        %v197 = vld [vmem:[%s170] sm:$0xff]
        %v198 = vld [vmem:[%s170 + $0x8] sm:$0xff]
        %v199 = vld [vmem:[%s170 + $0x10] sm:$0xff]
        %v200 = vld [vmem:[%s170 + $0x18] sm:$0xff]
        %v201 = vld [vmem:[%s170 + $0x20] sm:$0xff]
        %v202 = vld [vmem:[%s170 + $0x28] sm:$0xff]
        %v203 = vld [vmem:[%s170 + $0x30] sm:$0xff]
        %v204 = vld [vmem:[%s170 + $0x38] sm:$0xff]
        %205 = vrot.lane.b32.xlu0 %v197, 16
        %v206 = vpop.permute.xlu0 %205
        %207 = vrot.lane.b32.xlu0 %v198, 16
        %v208 = vpop.permute.xlu0 %207
        %209 = vrot.lane.b32.xlu0 %v199, 16
        %v210 = vpop.permute.xlu0 %209
        %211 = vrot.lane.b32.xlu0 %v200, 16
        %v212 = vpop.permute.xlu0 %211
        %213 = vrot.lane.b32.xlu0 %v201, 16
        %v214 = vpop.permute.xlu0 %213
        %215 = vrot.lane.b32.xlu0 %v202, 16
        %v216 = vpop.permute.xlu0 %215
        %217 = vrot.lane.b32.xlu0 %v203, 16
        %v218 = vpop.permute.xlu0 %217
        %219 = vrot.lane.b32.xlu0 %v204, 16
        %v220 = vpop.permute.xlu0 %219
        %v221 = vrot.slane %v206, 7
        %v222 = vrot.slane %v208, 7
        %v223 = vrot.slane %v210, 7
        %v224 = vrot.slane %v212, 7
        %v225 = vrot.slane %v214, 7
        %v226 = vrot.slane %v216, 7
        %v227 = vrot.slane %v218, 7
        %v228 = vrot.slane %v220, 7
        %v229 = vld [vmem:[#allocation5] sm:$0xff]
        %s230 = scalar_lea.vmem [#allocation5], 72
        %v231 = vld [vmem:[%s230] sm:$0xff]
        %s232 = scalar_lea.vmem [#allocation5], 144
        %v233 = vld [vmem:[%s232] sm:$0xff]
        %v234 = vmul.f32 %v221, %v231
        %v235 = vmul.f32 %v222, %v231
        %v236 = vmul.f32 %v223, %v231
        %v237 = vmul.f32 %v224, %v231
        %v238 = vmul.f32 %v225, %v231
        %v239 = vmul.f32 %v226, %v231
        %v240 = vmul.f32 %v227, %v231
        %v241 = vmul.f32 %v228, %v231
        %v242 = vadd.f32 %v234, 0.0
        %v243 = vadd.f32 %v235, 0.0
        %v244 = vadd.f32 %v236, 0.0
        %v245 = vadd.f32 %v237, 0.0
        %v246 = vadd.f32 %v238, 0.0
        %v247 = vadd.f32 %v239, 0.0
        %v248 = vadd.f32 %v240, 0.0
        %v249 = vadd.f32 %v241, 0.0
        %v250 = vmul.f32 %v221, %v229
        %v251 = vmul.f32 %v222, %v229
        %v252 = vmul.f32 %v223, %v229
        %v253 = vmul.f32 %v224, %v229
        %v254 = vmul.f32 %v225, %v229
        %v255 = vmul.f32 %v226, %v229
        %v256 = vmul.f32 %v227, %v229
        %v257 = vadd.f32 %v250, 0.0
        %v258 = vadd.f32 %v251, 0.0
        %v259 = vadd.f32 %v252, 0.0
        %v260 = vadd.f32 %v253, 0.0
        %v261 = vadd.f32 %v254, 0.0
        %v262 = vadd.f32 %v255, 0.0
        %v263 = vadd.f32 %v256, 0.0
        %v264 = vmul.f32 %v222, %v233
        %v265 = vmul.f32 %v223, %v233
        %v266 = vmul.f32 %v224, %v233
        %v267 = vmul.f32 %v225, %v233
        %v268 = vmul.f32 %v226, %v233
        %v269 = vmul.f32 %v227, %v233
        %v270 = vmul.f32 %v228, %v233
        %v271 = vadd.f32 %v264, 0.0
        %v272 = vadd.f32 %v265, 0.0
        %v273 = vadd.f32 %v266, 0.0
        %v274 = vadd.f32 %v267, 0.0
        %v275 = vadd.f32 %v268, 0.0
        %v276 = vadd.f32 %v269, 0.0
        %v277 = vadd.f32 %v270, 0.0
        %s278 = scalar_lea.vmem [#allocation5], 24
        %v279 = vld [vmem:[%s278] sm:$0xff]
        %s280 = scalar_lea.vmem [#allocation5], 96
        %v281 = vld [vmem:[%s280] sm:$0xff]
        %s282 = scalar_lea.vmem [#allocation5], 168
        %v283 = vld [vmem:[%s282] sm:$0xff]
        %v284 = vmul.f32 %v206, %v281
        %v285 = vmul.f32 %v208, %v281
        %v286 = vmul.f32 %v210, %v281
        %v287 = vmul.f32 %v212, %v281
        %v288 = vmul.f32 %v214, %v281
        %v289 = vmul.f32 %v216, %v281
        %v290 = vmul.f32 %v218, %v281
        %v291 = vmul.f32 %v220, %v281
        %v292 = vadd.f32 %v242, %v284
        %v293 = vadd.f32 %v243, %v285
        %v294 = vadd.f32 %v244, %v286
        %v295 = vadd.f32 %v245, %v287
        %v296 = vadd.f32 %v246, %v288
        %v297 = vadd.f32 %v247, %v289
        %v298 = vadd.f32 %v248, %v290
        %v299 = vadd.f32 %v249, %v291
        %v300 = vmul.f32 %v206, %v279
        %v301 = vmul.f32 %v208, %v279
        %v302 = vmul.f32 %v210, %v279
        %v303 = vmul.f32 %v212, %v279
        %v304 = vmul.f32 %v214, %v279
        %v305 = vmul.f32 %v216, %v279
        %v306 = vmul.f32 %v218, %v279
        %v307 = vadd.f32 %v257, %v300
        %v308 = vadd.f32 %v258, %v301
        %v309 = vadd.f32 %v259, %v302
        %v310 = vadd.f32 %v260, %v303
        %v311 = vadd.f32 %v261, %v304
        %v312 = vadd.f32 %v262, %v305
        %v313 = vadd.f32 %v263, %v306
        %v314 = vmul.f32 %v208, %v283
        %v315 = vmul.f32 %v210, %v283
        %v316 = vmul.f32 %v212, %v283
        %v317 = vmul.f32 %v214, %v283
        %v318 = vmul.f32 %v216, %v283
        %v319 = vmul.f32 %v218, %v283
        %v320 = vmul.f32 %v220, %v283
        %v321 = vadd.f32 %v271, %v314
        %v322 = vadd.f32 %v272, %v315
        %v323 = vadd.f32 %v273, %v316
        %v324 = vadd.f32 %v274, %v317
        %v325 = vadd.f32 %v275, %v318
        %v326 = vadd.f32 %v276, %v319
        %v327 = vadd.f32 %v277, %v320
        %v328 = vrot.slane %v206, 1
        %v329 = vrot.slane %v208, 1
        %v330 = vrot.slane %v210, 1
        %v331 = vrot.slane %v212, 1
        %v332 = vrot.slane %v214, 1
        %v333 = vrot.slane %v216, 1
        %v334 = vrot.slane %v218, 1
        %v335 = vrot.slane %v220, 1
        %s336 = scalar_lea.vmem [#allocation5], 48
        %v337 = vld [vmem:[%s336] sm:$0xff]
        %s338 = scalar_lea.vmem [#allocation5], 120
        %v339 = vld [vmem:[%s338] sm:$0xff]
        %s340 = scalar_lea.vmem [#allocation5], 192
        %v341 = vld [vmem:[%s340] sm:$0xff]
        %v342 = vmul.f32 %v328, %v339
        %v343 = vmul.f32 %v329, %v339
        %v344 = vmul.f32 %v330, %v339
        %v345 = vmul.f32 %v331, %v339
        %v346 = vmul.f32 %v332, %v339
        %v347 = vmul.f32 %v333, %v339
        %v348 = vmul.f32 %v334, %v339
        %v349 = vmul.f32 %v335, %v339
        %v350 = vadd.f32 %v292, %v342
        %v351 = vadd.f32 %v293, %v343
        %v352 = vadd.f32 %v294, %v344
        %v353 = vadd.f32 %v295, %v345
        %v354 = vadd.f32 %v296, %v346
        %v355 = vadd.f32 %v297, %v347
        %v356 = vadd.f32 %v298, %v348
        %v357 = vadd.f32 %v299, %v349
        %v358 = vmul.f32 %v328, %v337
        %v359 = vmul.f32 %v329, %v337
        %v360 = vmul.f32 %v330, %v337
        %v361 = vmul.f32 %v331, %v337
        %v362 = vmul.f32 %v332, %v337
        %v363 = vmul.f32 %v333, %v337
        %v364 = vmul.f32 %v334, %v337
        %v365 = vadd.f32 %v307, %v358
        %v366 = vadd.f32 %v308, %v359
        %v367 = vadd.f32 %v309, %v360
        %v368 = vadd.f32 %v310, %v361
        %v369 = vadd.f32 %v311, %v362
        %v370 = vadd.f32 %v312, %v363
        %v371 = vadd.f32 %v313, %v364
        %v372 = vmul.f32 %v329, %v341
        %v373 = vmul.f32 %v330, %v341
        %v374 = vmul.f32 %v331, %v341
        %v375 = vmul.f32 %v332, %v341
        %v376 = vmul.f32 %v333, %v341
        %v377 = vmul.f32 %v334, %v341
        %v378 = vmul.f32 %v335, %v341
        %v379 = vadd.f32 %v321, %v372
        %v380 = vadd.f32 %v322, %v373
        %v381 = vadd.f32 %v323, %v374
        %v382 = vadd.f32 %v324, %v375
        %v383 = vadd.f32 %v325, %v376
        %v384 = vadd.f32 %v326, %v377
        %v385 = vadd.f32 %v327, %v378
        %v386 = vrot.slane %v197, 7
        %v387 = vrot.slane %v198, 7
        %v388 = vrot.slane %v199, 7
        %v389 = vrot.slane %v200, 7
        %v390 = vrot.slane %v201, 7
        %v391 = vrot.slane %v202, 7
        %v392 = vrot.slane %v203, 7
        %v393 = vrot.slane %v204, 7
        %s394 = scalar_lea.vmem [#allocation5], 8
        %v395 = vld [vmem:[%s394] sm:$0xff]
        %s396 = scalar_lea.vmem [#allocation5], 80
        %v397 = vld [vmem:[%s396] sm:$0xff]
        %s398 = scalar_lea.vmem [#allocation5], 152
        %v399 = vld [vmem:[%s398] sm:$0xff]
        %v400 = vmul.f32 %v386, %v397
        %v401 = vmul.f32 %v387, %v397
        %v402 = vmul.f32 %v388, %v397
        %v403 = vmul.f32 %v389, %v397
        %v404 = vmul.f32 %v390, %v397
        %v405 = vmul.f32 %v391, %v397
        %v406 = vmul.f32 %v392, %v397
        %v407 = vmul.f32 %v393, %v397
        %v408 = vadd.f32 %v350, %v400
        %v409 = vadd.f32 %v351, %v401
        %v410 = vadd.f32 %v352, %v402
        %v411 = vadd.f32 %v353, %v403
        %v412 = vadd.f32 %v354, %v404
        %v413 = vadd.f32 %v355, %v405
        %v414 = vadd.f32 %v356, %v406
        %v415 = vadd.f32 %v357, %v407
        %v416 = vmul.f32 %v386, %v395
        %v417 = vmul.f32 %v387, %v395
        %v418 = vmul.f32 %v388, %v395
        %v419 = vmul.f32 %v389, %v395
        %v420 = vmul.f32 %v390, %v395
        %v421 = vmul.f32 %v391, %v395
        %v422 = vmul.f32 %v392, %v395
        %v423 = vadd.f32 %v365, %v416
        %v424 = vadd.f32 %v366, %v417
        %v425 = vadd.f32 %v367, %v418
        %v426 = vadd.f32 %v368, %v419
        %v427 = vadd.f32 %v369, %v420
        %v428 = vadd.f32 %v370, %v421
        %v429 = vadd.f32 %v371, %v422
        %v430 = vmul.f32 %v387, %v399
        %v431 = vmul.f32 %v388, %v399
        %v432 = vmul.f32 %v389, %v399
        %v433 = vmul.f32 %v390, %v399
        %v434 = vmul.f32 %v391, %v399
        %v435 = vmul.f32 %v392, %v399
        %v436 = vmul.f32 %v393, %v399
        %v437 = vadd.f32 %v379, %v430
        %v438 = vadd.f32 %v380, %v431
        %v439 = vadd.f32 %v381, %v432
        %v440 = vadd.f32 %v382, %v433
        %v441 = vadd.f32 %v383, %v434
        %v442 = vadd.f32 %v384, %v435
        %v443 = vadd.f32 %v385, %v436
        %s444 = scalar_lea.vmem [#allocation5], 32
        %v445 = vld [vmem:[%s444] sm:$0xff]
        %s446 = scalar_lea.vmem [#allocation5], 104
        %v447 = vld [vmem:[%s446] sm:$0xff]
        %s448 = scalar_lea.vmem [#allocation5], 176
        %v449 = vld [vmem:[%s448] sm:$0xff]
        %v450 = vmul.f32 %v197, %v447
        %v451 = vmul.f32 %v198, %v447
        %v452 = vmul.f32 %v199, %v447
        %v453 = vmul.f32 %v200, %v447
        %v454 = vmul.f32 %v201, %v447
        %v455 = vmul.f32 %v202, %v447
        %v456 = vmul.f32 %v203, %v447
        %v457 = vmul.f32 %v204, %v447
        %v458 = vadd.f32 %v408, %v450
        %v459 = vadd.f32 %v409, %v451
        %v460 = vadd.f32 %v410, %v452
        %v461 = vadd.f32 %v411, %v453
        %v462 = vadd.f32 %v412, %v454
        %v463 = vadd.f32 %v413, %v455
        %v464 = vadd.f32 %v414, %v456
        %v465 = vadd.f32 %v415, %v457
        %v466 = vmul.f32 %v197, %v445
        %v467 = vmul.f32 %v198, %v445
        %v468 = vmul.f32 %v199, %v445
        %v469 = vmul.f32 %v200, %v445
        %v470 = vmul.f32 %v201, %v445
        %v471 = vmul.f32 %v202, %v445
        %v472 = vmul.f32 %v203, %v445
        %v473 = vadd.f32 %v423, %v466
        %v474 = vadd.f32 %v424, %v467
        %v475 = vadd.f32 %v425, %v468
        %v476 = vadd.f32 %v426, %v469
        %v477 = vadd.f32 %v427, %v470
        %v478 = vadd.f32 %v428, %v471
        %v479 = vadd.f32 %v429, %v472
        %v480 = vmul.f32 %v198, %v449
        %v481 = vmul.f32 %v199, %v449
        %v482 = vmul.f32 %v200, %v449
        %v483 = vmul.f32 %v201, %v449
        %v484 = vmul.f32 %v202, %v449
        %v485 = vmul.f32 %v203, %v449
        %v486 = vmul.f32 %v204, %v449
        %v487 = vadd.f32 %v437, %v480
        %v488 = vadd.f32 %v438, %v481
        %v489 = vadd.f32 %v439, %v482
        %v490 = vadd.f32 %v440, %v483
        %v491 = vadd.f32 %v441, %v484
        %v492 = vadd.f32 %v442, %v485
        %v493 = vadd.f32 %v443, %v486
        %v494 = vrot.slane %v197, 1
        %v495 = vrot.slane %v198, 1
        %v496 = vrot.slane %v199, 1
        %v497 = vrot.slane %v200, 1
        %v498 = vrot.slane %v201, 1
        %v499 = vrot.slane %v202, 1
        %v500 = vrot.slane %v203, 1
        %v501 = vrot.slane %v204, 1
        %s502 = scalar_lea.vmem [#allocation5], 56
        %v503 = vld [vmem:[%s502] sm:$0xff]
        %s504 = scalar_lea.vmem [#allocation5], 128
        %v505 = vld [vmem:[%s504] sm:$0xff]
        %s506 = scalar_lea.vmem [#allocation5], 200
        %v507 = vld [vmem:[%s506] sm:$0xff]
        %v508 = vmul.f32 %v494, %v505
        %v509 = vmul.f32 %v495, %v505
        %v510 = vmul.f32 %v496, %v505
        %v511 = vmul.f32 %v497, %v505
        %v512 = vmul.f32 %v498, %v505
        %v513 = vmul.f32 %v499, %v505
        %v514 = vmul.f32 %v500, %v505
        %v515 = vmul.f32 %v501, %v505
        %v516 = vadd.f32 %v458, %v508
        %v517 = vadd.f32 %v459, %v509
        %v518 = vadd.f32 %v460, %v510
        %v519 = vadd.f32 %v461, %v511
        %v520 = vadd.f32 %v462, %v512
        %v521 = vadd.f32 %v463, %v513
        %v522 = vadd.f32 %v464, %v514
        %v523 = vadd.f32 %v465, %v515
        %v524 = vmul.f32 %v494, %v503
        %v525 = vmul.f32 %v495, %v503
        %v526 = vmul.f32 %v496, %v503
        %v527 = vmul.f32 %v497, %v503
        %v528 = vmul.f32 %v498, %v503
        %v529 = vmul.f32 %v499, %v503
        %v530 = vmul.f32 %v500, %v503
        %v531 = vadd.f32 %v473, %v524
        %v532 = vadd.f32 %v474, %v525
        %v533 = vadd.f32 %v475, %v526
        %v534 = vadd.f32 %v476, %v527
        %v535 = vadd.f32 %v477, %v528
        %v536 = vadd.f32 %v478, %v529
        %v537 = vadd.f32 %v479, %v530
        %v538 = vmul.f32 %v495, %v507
        %v539 = vmul.f32 %v496, %v507
        %v540 = vmul.f32 %v497, %v507
        %v541 = vmul.f32 %v498, %v507
        %v542 = vmul.f32 %v499, %v507
        %v543 = vmul.f32 %v500, %v507
        %v544 = vmul.f32 %v501, %v507
        %v545 = vadd.f32 %v487, %v538
        %v546 = vadd.f32 %v488, %v539
        %v547 = vadd.f32 %v489, %v540
        %v548 = vadd.f32 %v490, %v541
        %v549 = vadd.f32 %v491, %v542
        %v550 = vadd.f32 %v492, %v543
        %v551 = vadd.f32 %v493, %v544
        %552 = vrot.lane.b32.xlu0 %v197, 112
        %v553 = vpop.permute.xlu0 %552
        %554 = vrot.lane.b32.xlu0 %v198, 112
        %v555 = vpop.permute.xlu0 %554
        %556 = vrot.lane.b32.xlu0 %v199, 112
        %v557 = vpop.permute.xlu0 %556
        %558 = vrot.lane.b32.xlu0 %v200, 112
        %v559 = vpop.permute.xlu0 %558
        %560 = vrot.lane.b32.xlu0 %v201, 112
        %v561 = vpop.permute.xlu0 %560
        %562 = vrot.lane.b32.xlu0 %v202, 112
        %v563 = vpop.permute.xlu0 %562
        %564 = vrot.lane.b32.xlu0 %v203, 112
        %v565 = vpop.permute.xlu0 %564
        %566 = vrot.lane.b32.xlu0 %v204, 112
        %v567 = vpop.permute.xlu0 %566
        %v568 = vrot.slane %v553, 7
        %v569 = vrot.slane %v555, 7
        %v570 = vrot.slane %v557, 7
        %v571 = vrot.slane %v559, 7
        %v572 = vrot.slane %v561, 7
        %v573 = vrot.slane %v563, 7
        %v574 = vrot.slane %v565, 7
        %v575 = vrot.slane %v567, 7
        %s576 = scalar_lea.vmem [#allocation5], 16
        %v577 = vld [vmem:[%s576] sm:$0xff]
        %s578 = scalar_lea.vmem [#allocation5], 88
        %v579 = vld [vmem:[%s578] sm:$0xff]
        %s580 = scalar_lea.vmem [#allocation5], 160
        %v581 = vld [vmem:[%s580] sm:$0xff]
        %v582 = vmul.f32 %v568, %v579
        %v583 = vmul.f32 %v569, %v579
        %v584 = vmul.f32 %v570, %v579
        %v585 = vmul.f32 %v571, %v579
        %v586 = vmul.f32 %v572, %v579
        %v587 = vmul.f32 %v573, %v579
        %v588 = vmul.f32 %v574, %v579
        %v589 = vmul.f32 %v575, %v579
        %v590 = vadd.f32 %v516, %v582
        %v591 = vadd.f32 %v517, %v583
        %v592 = vadd.f32 %v518, %v584
        %v593 = vadd.f32 %v519, %v585
        %v594 = vadd.f32 %v520, %v586
        %v595 = vadd.f32 %v521, %v587
        %v596 = vadd.f32 %v522, %v588
        %v597 = vadd.f32 %v523, %v589
        %v598 = vmul.f32 %v568, %v577
        %v599 = vmul.f32 %v569, %v577
        %v600 = vmul.f32 %v570, %v577
        %v601 = vmul.f32 %v571, %v577
        %v602 = vmul.f32 %v572, %v577
        %v603 = vmul.f32 %v573, %v577
        %v604 = vmul.f32 %v574, %v577
        %v605 = vadd.f32 %v531, %v598
        %v606 = vadd.f32 %v532, %v599
        %v607 = vadd.f32 %v533, %v600
        %v608 = vadd.f32 %v534, %v601
        %v609 = vadd.f32 %v535, %v602
        %v610 = vadd.f32 %v536, %v603
        %v611 = vadd.f32 %v537, %v604
        %v612 = vmul.f32 %v569, %v581
        %v613 = vmul.f32 %v570, %v581
        %v614 = vmul.f32 %v571, %v581
        %v615 = vmul.f32 %v572, %v581
        %v616 = vmul.f32 %v573, %v581
        %v617 = vmul.f32 %v574, %v581
        %v618 = vmul.f32 %v575, %v581
        %v619 = vadd.f32 %v545, %v612
        %v620 = vadd.f32 %v546, %v613
        %v621 = vadd.f32 %v547, %v614
        %v622 = vadd.f32 %v548, %v615
        %v623 = vadd.f32 %v549, %v616
        %v624 = vadd.f32 %v550, %v617
        %v625 = vadd.f32 %v551, %v618
        %s626 = scalar_lea.vmem [#allocation5], 40
        %v627 = vld [vmem:[%s626] sm:$0xff]
        %s628 = scalar_lea.vmem [#allocation5], 112
        %v629 = vld [vmem:[%s628] sm:$0xff]
        %s630 = scalar_lea.vmem [#allocation5], 184
        %v631 = vld [vmem:[%s630] sm:$0xff]
        %v632 = vmul.f32 %v553, %v629
        %v633 = vmul.f32 %v555, %v629
        %v634 = vmul.f32 %v557, %v629
        %v635 = vmul.f32 %v559, %v629
        %v636 = vmul.f32 %v561, %v629
        %v637 = vmul.f32 %v563, %v629
        %v638 = vmul.f32 %v565, %v629
        %v639 = vmul.f32 %v567, %v629
        %v640 = vadd.f32 %v590, %v632
        %v641 = vadd.f32 %v591, %v633
        %v642 = vadd.f32 %v592, %v634
        %v643 = vadd.f32 %v593, %v635
        %v644 = vadd.f32 %v594, %v636
        %v645 = vadd.f32 %v595, %v637
        %v646 = vadd.f32 %v596, %v638
        %v647 = vadd.f32 %v597, %v639
        %v648 = vmul.f32 %v553, %v627
        %v649 = vmul.f32 %v555, %v627
        %v650 = vmul.f32 %v557, %v627
        %v651 = vmul.f32 %v559, %v627
        %v652 = vmul.f32 %v561, %v627
        %v653 = vmul.f32 %v563, %v627
        %v654 = vmul.f32 %v565, %v627
        %v655 = vadd.f32 %v605, %v648
        %v656 = vadd.f32 %v606, %v649
        %v657 = vadd.f32 %v607, %v650
        %v658 = vadd.f32 %v608, %v651
        %v659 = vadd.f32 %v609, %v652
        %v660 = vadd.f32 %v610, %v653
        %v661 = vadd.f32 %v611, %v654
        %v662 = vmul.f32 %v555, %v631
        %v663 = vmul.f32 %v557, %v631
        %v664 = vmul.f32 %v559, %v631
        %v665 = vmul.f32 %v561, %v631
        %v666 = vmul.f32 %v563, %v631
        %v667 = vmul.f32 %v565, %v631
        %v668 = vmul.f32 %v567, %v631
        %v669 = vadd.f32 %v619, %v662
        %v670 = vadd.f32 %v620, %v663
        %v671 = vadd.f32 %v621, %v664
        %v672 = vadd.f32 %v622, %v665
        %v673 = vadd.f32 %v623, %v666
        %v674 = vadd.f32 %v624, %v667
        %v675 = vadd.f32 %v625, %v668
        %v676 = vrot.slane %v553, 1
        %v677 = vrot.slane %v555, 1
        %v678 = vrot.slane %v557, 1
        %v679 = vrot.slane %v559, 1
        %v680 = vrot.slane %v561, 1
        %v681 = vrot.slane %v563, 1
        %v682 = vrot.slane %v565, 1
        %v683 = vrot.slane %v567, 1
        %s684 = scalar_lea.vmem [#allocation5], 64
        %v685 = vld [vmem:[%s684] sm:$0xff]
        %s686 = scalar_lea.vmem [#allocation5], 136
        %v687 = vld [vmem:[%s686] sm:$0xff]
        %s688 = scalar_lea.vmem [#allocation5], 208
        %v689 = vld [vmem:[%s688] sm:$0xff]
        %v690 = vmul.f32 %v676, %v687
        %v691 = vmul.f32 %v677, %v687
        %v692 = vmul.f32 %v678, %v687
        %v693 = vmul.f32 %v679, %v687
        %v694 = vmul.f32 %v680, %v687
        %v695 = vmul.f32 %v681, %v687
        %v696 = vmul.f32 %v682, %v687
        %v697 = vmul.f32 %v683, %v687
        %v698 = vadd.f32 %v640, %v690
        %v699 = vadd.f32 %v641, %v691
        %v700 = vadd.f32 %v642, %v692
        %v701 = vadd.f32 %v643, %v693
        %v702 = vadd.f32 %v644, %v694
        %v703 = vadd.f32 %v645, %v695
        %v704 = vadd.f32 %v646, %v696
        %v705 = vadd.f32 %v647, %v697
        %v706 = vmul.f32 %v676, %v685
        %v707 = vmul.f32 %v677, %v685
        %v708 = vmul.f32 %v678, %v685
        %v709 = vmul.f32 %v679, %v685
        %v710 = vmul.f32 %v680, %v685
        %v711 = vmul.f32 %v681, %v685
        %v712 = vmul.f32 %v682, %v685
        %v713 = vadd.f32 %v655, %v706
        %v714 = vadd.f32 %v656, %v707
        %v715 = vadd.f32 %v657, %v708
        %v716 = vadd.f32 %v658, %v709
        %v717 = vadd.f32 %v659, %v710
        %v718 = vadd.f32 %v660, %v711
        %v719 = vadd.f32 %v661, %v712
        %v720 = vmul.f32 %v677, %v689
        %v721 = vmul.f32 %v678, %v689
        %v722 = vmul.f32 %v679, %v689
        %v723 = vmul.f32 %v680, %v689
        %v724 = vmul.f32 %v681, %v689
        %v725 = vmul.f32 %v682, %v689
        %v726 = vmul.f32 %v683, %v689
        %v727 = vadd.f32 %v669, %v720
        %v728 = vadd.f32 %v670, %v721
        %v729 = vadd.f32 %v671, %v722
        %v730 = vadd.f32 %v672, %v723
        %v731 = vadd.f32 %v673, %v724
        %v732 = vadd.f32 %v674, %v725
        %v733 = vadd.f32 %v675, %v726
        %v734 = vadd.f32 %v698, 0.0
        %v735 = vadd.f32 %v699, %v713
        %v736 = vadd.f32 %v700, %v714
        %v737 = vadd.f32 %v701, %v715
        %v738 = vadd.f32 %v702, %v716
        %v739 = vadd.f32 %v703, %v717
        %v740 = vadd.f32 %v704, %v718
        %v741 = vadd.f32 %v705, %v719
        %v742 = vadd.f32 %v734, %v727
        %v743 = vadd.f32 %v735, %v728
        %v744 = vadd.f32 %v736, %v729
        %v745 = vadd.f32 %v737, %v730
        %v746 = vadd.f32 %v738, %v731
        %v747 = vadd.f32 %v739, %v732
        %v748 = vadd.f32 %v740, %v733
        %v749 = vadd.f32 %v741, 0.0
        %750 = vst [vmem:[%s194] sm:$0xff] %v742
        %751 = vst [vmem:[%s194 + $0x8] sm:$0xff] %v743
        %752 = vst [vmem:[%s194 + $0x10] sm:$0xff] %v744
        %753 = vst [vmem:[%s194 + $0x18] sm:$0xff] %v745
        %754 = vst [vmem:[%s194 + $0x20] sm:$0xff] %v746
        %755 = vst [vmem:[%s194 + $0x28] sm:$0xff] %v747
        %756 = vst [vmem:[%s194 + $0x30] sm:$0xff] %v748
        %757 = vst [vmem:[%s194 + $0x38] sm:$0xff] %v749
        %s758 = sand.u32 %s91, 1
        %s759 = scalar_lea.sflag [#allocation4], %s758
        %s760 = sand.u32 %s91, 1
        %s761 = smul.addr %s760, 64
        %s762 = scalar_lea.vmem [#allocation7], %s761
        // Predicated region
        $region37: #{tpu_custom_call.1} parent=27 // pred_check
          %p763 = pneg %p101
        $region38: #{tpu_custom_call.1} parent=27 // pred_check_branch
          %765 = sbr.rel (%p763) target = $region40
        $region39: #{tpu_custom_call.1} parent=27 // pred_region
          %s766 = smul.u32 8, %s25
          %s768 = ssub.s32 1024, 1024
          %769 = vsyncadd %s759, %s768
          %s770 = smul.addr %s24, 8
          %s771 = sadd.s32 %s766, %s770
          %s772 = smul.addr %s771, 128
          %s773 = scalar_lea.hbm %s2, %s772
          %s774 = sshll.u32 %s762, 4
          %s775 = int_to_ptr.vmem [resolvable:$true] %s774
          %780 = dma.vmem_to_hbm [thread:$0]  %s775, 1024, %s773, %s759, 128, 128, 8
        $region40: #{tpu_custom_call.1} parent=27 // pred_fallthru
          _
      $region28: #{tpu_custom_call.1} parent=5 // pred_fallthru
        _
      %p781 = scmp.le.s32.totalorder 2, %s15
      // Predicated region
      $region41: #{tpu_custom_call.1} parent=5 // pred_check
        %p782 = pneg %p781
      $region42: #{tpu_custom_call.1} parent=5 // pred_check_branch
        %784 = sbr.rel (%p782) target = $region44
      $region43: #{tpu_custom_call.1} parent=5 // pred_region
        %s785 = ssub.s32 %s15, 2
        // Predicated region
        $region45: #{tpu_custom_call.1} parent=43 // pred_check
          %p786 = pneg %p107
        $region46: #{tpu_custom_call.1} parent=43 // pred_check_branch
          %788 = sbr.rel (%p786) target = $region48
        $region47: #{tpu_custom_call.1} parent=43 // pred_region
          %s789 = sand.u32 %s92, 1
          %s790 = scalar_lea.sflag [#allocation4], %s789
          %s791 = sand.u32 %s92, 1
          %s792 = smul.addr %s791, 64
          %s793 = scalar_lea.vmem [#allocation7], %s792
          %794 = dma.done %s790, 1024
        $region48: #{tpu_custom_call.1} parent=43 // pred_fallthru
          _
      $region44: #{tpu_custom_call.1} parent=5 // pred_fallthru
        _
    $region6: #{tpu_custom_call.1} parent=1 // loop_footer
      %s19 = sadd.s32 1, %s15
    $region7: #{tpu_custom_call.1} parent=1 // loop_footer_branch
      %14 = sbr.rel target = $region3
    $region8: #{tpu_custom_call.1} parent=1 // loop_exit
      _
    %795 = vsyncpa [#allocation3], 1
    %s796 = scalar_lea.sflag [#allocation3], 1
    %797 = vsyncpa %s796, 1
    %798 = vsyncpa [#allocation6], 1
    %799 = vsyncpa [#allocation4], 1
    %s800 = scalar_lea.sflag [#allocation4], 1
    %801 = vsyncpa %s800, 1

</llo_original>
